<compile_context>
chip_gen: v7x
topology: tpu7x:2x2x1
jax: 0.10.0
libtpu: 0.0.40
codegen_flags: <defaults>
</compile_context>

<pallas_src>
import jax
import jax.numpy as jnp
from jax.experimental import pallas as pl
from jax.experimental.pallas import tpu as pltpu


def _round_up(x, m):
    return ((x + m - 1) // m) * m


def _nll_loss_ref(pred, target):
    """Plain-JAX fallback for tiny inputs (identical math to the kernel)."""
    b = pred.shape[0]
    return -jnp.mean(pred.astype(jnp.float32)[jnp.arange(b), target])


def _make_nll_kernel(neg_inv_b: float, group: int):
    """neg_inv_b is a plain Python float -> compile-time literal (no captured
    jax.Array constants in the kernel closure)."""

    def kernel(pred_ref, tlane_ref, out_ref, acc_ref):
        pid = pl.program_id(0)

        @pl.when(pid == 0)
        def _():
            acc_ref[...] = jnp.zeros_like(acc_ref)

        pred = pred_ref[...].astype(jnp.float32)            # (TR, Cp) f32 accumulation
        n_rows, n_lanes = pred.shape
        col = jax.lax.broadcasted_iota(jnp.int32, (n_rows, n_lanes), 1)

        # One-hot "gather": compare the lane iota against the packed target lane
        # of each group slot, OR over slots (static unroll).  Rows past the real
        # batch (partial last block / packing padding) carry the -1 sentinel in
        # tlane, so they never match.
        tl = tlane_ref[...]                                  # (TR, group) int32
        mask = col == tl[:, 0:1]
        for g in range(1, group):
            mask = jnp.logical_or(mask, col == tl[:, g:g + 1])

        # Select (NOT multiply) so garbage/NaN rows of a partial block never
        # poison the sum; reduce the whole tile into the resident VMEM scratch.
        picked = jnp.where(mask, pred, 0.0)
        acc_ref[...] += jnp.sum(picked)

        @pl.when(pid == pl.num_programs(0) - 1)
        def _():
            # nll_loss negation + mean folded into a single literal multiply.
            out_ref[...] = acc_ref[...] * neg_inv_b

    return kernel


def get_loss(pred, target, trans_feat=None, *, tile_rows=8192,
             vmem_block_bytes=4 * 1024 * 1024, small_fallback_bytes=1 << 20):
    """Pallas equivalent of get_loss().forward(pred, target, trans_feat)."""
    del trans_feat  # unused by the reference loss
    B, C = pred.shape
    target = target.astype(jnp.int32)
    itemsize = jnp.dtype(pred.dtype).itemsize

    # Tiny inputs: pallas_call launch + per-step overhead dwarfs the math.
    if B * C * itemsize < small_fallback_bytes:
        return _nll_loss_ref(pred, target)

    # Lane-dense packing: fold `group` consecutive rows into one <=128-lane row.
    # Only allowed when it is a *free* contiguous reshape (no jnp.pad on pred —
    # that would read+write a second full copy of pred in HBM).
    group = max(1, 128 // C) if C <= 128 else 1
    if B % group != 0:
        group = 1
    c_packed = group * C
    rows = B // group

    # Class index -> lane index inside the packed row.
    tlane = (jnp.arange(B, dtype=jnp.int32) % group) * C + target        # (B,)

    # Tile rows: as large as possible, capped so a single pred buffer stays
    # ~<= vmem_block_bytes (double-buffered ~8 MiB, safe on v5e/v6e/v7x).
    sub = 8 * max(1, 4 // itemsize)                 # f32 -> 8, bf16 -> 16, 8-bit -> 32
    cap = max(sub, (vmem_block_bytes // (c_packed * itemsize)) // sub * sub)
    tr = min(_round_up(tile_rows, sub), cap, _round_up(rows, sub))
    num_tiles = pl.cdiv(rows, tr)
    rows_p = num_tiles * tr

    # pred: pure free reshape, no copy.  Only the tiny target array is padded,
    # with the -1 sentinel, out to the full grid extent so every partial /
    # over-covering pred block is fully masked.
    pred_p = pred.reshape(rows, c_packed)
    tlane_p = jnp.pad(tlane, (0, rows_p * group - B),
                      constant_values=-1).reshape(rows_p, group)

    kernel = _make_nll_kernel(-1.0 / B, group)      # plain Python float

    out = pl.pallas_call(
        kernel,
        out_shape=jax.ShapeDtypeStruct((1, 1), jnp.float32),
        grid=(num_tiles,),
        in_specs=[
            pl.BlockSpec((tr, c_packed), lambda i: (i, 0)),
            pl.BlockSpec((tr, group), lambda i: (i, 0)),
        ],
        out_specs=pl.BlockSpec((1, 1), lambda i: (0, 0)),
        scratch_shapes=[pltpu.VMEM((1, 1), jnp.float32)],
        compiler_params=pltpu.CompilerParams(
            dimension_semantics=("arbitrary",)),
    )(pred_p, tlane_p)
    return out[0, 0]


if __name__ == "__main__":
    key = jax.random.PRNGKey(0)
    k0, k1, k2, k3, k4, k5, k6, k7, k8 = jax.random.split(key, 9)

    # 1) Reference-sized shapes (B=8, C=16): below the size threshold the
    #    wrapper intentionally uses the plain-JAX path.
    B, C = 8, 16
    pred = jax.nn.log_softmax(jax.random.normal(k0, (B, C), jnp.float32), axis=-1)
    target = jax.random.randint(k1, (B,), 0, C, dtype=jnp.int32)
    trans_feat = jax.random.normal(k2, (B, 3, 3), jnp.float32)   # unused, like the module
    loss = jax.block_until_ready(get_loss(pred, target, trans_feat))
    ref = -jnp.mean(pred[jnp.arange(B), target])
    assert jnp.allclose(loss, ref, atol=1e-6, rtol=1e-6), (loss, ref)

    # 2) Kernel path: bf16 pred, lane packing (C=16 -> group 8), multiple grid
    #    tiles, partial (unpadded) last pred block.
    B2, C2 = 600, 16
    pred2 = jax.nn.log_softmax(jax.random.normal(k3, (B2, C2), jnp.float32),
                               axis=-1).astype(jnp.bfloat16)
    target2 = jax.random.randint(k4, (B2,), 0, C2, dtype=jnp.int32)
    loss2 = jax.block_until_ready(
        get_loss(pred2, target2, None, tile_rows=32, small_fallback_bytes=0))
    ref2 = -jnp.mean(pred2.astype(jnp.float32)[jnp.arange(B2), target2])
    assert jnp.allclose(loss2, ref2, atol=1e-4, rtol=1e-4), (loss2, ref2)

    # 3) Kernel path: ModelNet40 head (C=40) with generalized packing
    #    (group=3 -> 120/128 lanes), multi-tile + partial last block.
    B3, C3 = 513, 40
    pred3 = jax.nn.log_softmax(jax.random.normal(k5, (B3, C3), jnp.float32), axis=-1)
    target3 = jax.random.randint(k6, (B3,), 0, C3, dtype=jnp.int32)
    loss3 = jax.block_until_ready(
        get_loss(pred3, target3, None, tile_rows=64, small_fallback_bytes=0))
    ref3 = -jnp.mean(pred3[jnp.arange(B3), target3])
    assert jnp.allclose(loss3, ref3, atol=1e-5, rtol=1e-5), (loss3, ref3)

    # 4) Kernel path: B not a multiple of the pack group -> unpacked (group=1),
    #    narrow-lane blocks, partial last block.
    B4, C4 = 37, 40
    pred4 = jax.nn.log_softmax(jax.random.normal(k7, (B4, C4), jnp.float32), axis=-1)
    target4 = jax.random.randint(k8, (B4,), 0, C4, dtype=jnp.int32)
    loss4 = jax.block_until_ready(
        get_loss(pred4, target4, None, tile_rows=16, small_fallback_bytes=0))
    ref4 = -jnp.mean(pred4[jnp.arange(B4), target4])
    assert jnp.allclose(loss4, ref4, atol=1e-5, rtol=1e-5), (loss4, ref4)

    print("KERNEL_OK")
</pallas_src>

<mosaic_0001>
module attributes {stable_mosaic.version = 11 : i64} {
  func.func @kernel(%arg0: i32, %arg1: memref<32x128xbf16, #tpu.memory_space<vmem>>, %arg2: memref<32x8xi32, #tpu.memory_space<vmem>>, %arg3: memref<1x1xf32, #tpu.memory_space<vmem>>, %arg4: memref<1x1xf32, #tpu.memory_space<vmem>>) attributes {dimension_semantics = [#tpu.dimension_semantics<arbitrary>], iteration_bounds = array<i64: 3>, scalar_prefetch = 0 : i64, scratch_operands = 1 : i64, tpu.core_type = #tpu.core_type<tc>, window_params = [{transform_indices = @transform_0, window_bounds = array<i64: 32, 128>}, {transform_indices = @transform_1, window_bounds = array<i64: 32, 8>}, {pipeline_mode = #tpu.pipeline_mode<synchronous>, transform_indices = @transform_2, window_bounds = array<i64: 1, 1>}]} {
    %c0_i32 = arith.constant 0 : i32
    %0 = arith.cmpi eq, %arg0, %c0_i32 : i32
    %1 = arith.extui %0 : i1 to i32
    %c0_i32_0 = arith.constant 0 : i32
    %2 = arith.cmpi ne, %1, %c0_i32_0 : i32
    scf.if %2 {
      %cst_10 = arith.constant 0.000000e+00 : f32
      %51 = vector.broadcast %cst_10 : f32 to vector<1x1xf32>
      %c0_11 = arith.constant 0 : index
      %c0_12 = arith.constant 0 : index
      %52 = vector.load %arg4[%c0_11, %c0_12] : memref<1x1xf32, #tpu.memory_space<vmem>>, vector<1x1xf32>
      tpu.vector_store %arg4[%c0_11, %c0_12], %51 {strides = array<i32>} : memref<1x1xf32, #tpu.memory_space<vmem>>, vector<1x1xf32>,
    } else {
    }
    %c0 = arith.constant 0 : index
    %c0_1 = arith.constant 0 : index
    %3 = vector.load %arg1[%c0, %c0_1] : memref<32x128xbf16, #tpu.memory_space<vmem>>, vector<32x128xbf16>
    %4 = arith.extf %3 : vector<32x128xbf16> to vector<32x128xf32>
    %5 = tpu.iota {dimensions = array<i32: 1>} : vector<32x128xi32>
    %c0_2 = arith.constant 0 : index
    %c0_3 = arith.constant 0 : index
    %6 = vector.load %arg2[%c0_2, %c0_3] : memref<32x8xi32, #tpu.memory_space<vmem>>, vector<32x8xi32>
    %7 = vector.extract_strided_slice %6 {offsets = [0, 0], sizes = [32, 1], strides = [1, 1]} : vector<32x8xi32> to vector<32x1xi32>
    %8 = vector.broadcast %7 : vector<32x1xi32> to vector<32x128xi32>
    %9 = arith.cmpi eq, %5, %8 : vector<32x128xi32>
    %10 = vector.extract_strided_slice %6 {offsets = [0, 1], sizes = [32, 1], strides = [1, 1]} : vector<32x8xi32> to vector<32x1xi32>
    %11 = vector.broadcast %10 : vector<32x1xi32> to vector<32x128xi32>
    %12 = arith.cmpi eq, %5, %11 : vector<32x128xi32>
    %13 = arith.ori %9, %12 : vector<32x128xi1>
    %14 = vector.extract_strided_slice %6 {offsets = [0, 2], sizes = [32, 1], strides = [1, 1]} : vector<32x8xi32> to vector<32x1xi32>
    %15 = vector.broadcast %14 : vector<32x1xi32> to vector<32x128xi32>
    %16 = arith.cmpi eq, %5, %15 : vector<32x128xi32>
    %17 = arith.ori %13, %16 : vector<32x128xi1>
    %18 = vector.extract_strided_slice %6 {offsets = [0, 3], sizes = [32, 1], strides = [1, 1]} : vector<32x8xi32> to vector<32x1xi32>
    %19 = vector.broadcast %18 : vector<32x1xi32> to vector<32x128xi32>
    %20 = arith.cmpi eq, %5, %19 : vector<32x128xi32>
    %21 = arith.ori %17, %20 : vector<32x128xi1>
    %22 = vector.extract_strided_slice %6 {offsets = [0, 4], sizes = [32, 1], strides = [1, 1]} : vector<32x8xi32> to vector<32x1xi32>
    %23 = vector.broadcast %22 : vector<32x1xi32> to vector<32x128xi32>
    %24 = arith.cmpi eq, %5, %23 : vector<32x128xi32>
    %25 = arith.ori %21, %24 : vector<32x128xi1>
    %26 = vector.extract_strided_slice %6 {offsets = [0, 5], sizes = [32, 1], strides = [1, 1]} : vector<32x8xi32> to vector<32x1xi32>
    %27 = vector.broadcast %26 : vector<32x1xi32> to vector<32x128xi32>
    %28 = arith.cmpi eq, %5, %27 : vector<32x128xi32>
    %29 = arith.ori %25, %28 : vector<32x128xi1>
    %30 = vector.extract_strided_slice %6 {offsets = [0, 6], sizes = [32, 1], strides = [1, 1]} : vector<32x8xi32> to vector<32x1xi32>
    %31 = vector.broadcast %30 : vector<32x1xi32> to vector<32x128xi32>
    %32 = arith.cmpi eq, %5, %31 : vector<32x128xi32>
    %33 = arith.ori %29, %32 : vector<32x128xi1>
    %34 = vector.extract_strided_slice %6 {offsets = [0, 7], sizes = [32, 1], strides = [1, 1]} : vector<32x8xi32> to vector<32x1xi32>
    %35 = vector.broadcast %34 : vector<32x1xi32> to vector<32x128xi32>
    %36 = arith.cmpi eq, %5, %35 : vector<32x128xi32>
    %37 = arith.ori %33, %36 : vector<32x128xi1>
    %cst = arith.constant 0.000000e+00 : f32
    %38 = vector.broadcast %cst : f32 to vector<32x128xf32>
    %39 = arith.select %37, %4, %38 : vector<32x128xi1>, vector<32x128xf32>
    %c0_4 = arith.constant 0 : index
    %c0_5 = arith.constant 0 : index
    %40 = vector.load %arg4[%c0_4, %c0_5] : memref<1x1xf32, #tpu.memory_space<vmem>>, vector<1x1xf32>
    %41 = vector.shape_cast %39 : vector<32x128xf32> to vector<1x32x128xf32>
    %cst_6 = arith.constant dense<0.000000e+00> : vector<1xf32>
    %42 = vector.multi_reduction <add>, %41, %cst_6 [1, 2] : vector<1x32x128xf32> to vector<1xf32>
    %43 = vector.shape_cast %42 : vector<1xf32> to vector<1x1x1xf32>
    %44 = vector.extract %43[0, 0, 0] : f32 from vector<1x1x1xf32>
    %45 = vector.broadcast %44 : f32 to vector<1x1xf32>
    %46 = arith.addf %40, %45 : vector<1x1xf32>
    %c0_7 = arith.constant 0 : index
    %c0_8 = arith.constant 0 : index
    %47 = vector.load %arg4[%c0_7, %c0_8] : memref<1x1xf32, #tpu.memory_space<vmem>>, vector<1x1xf32>
    tpu.vector_store %arg4[%c0_7, %c0_8], %46 {strides = array<i32>} : memref<1x1xf32, #tpu.memory_space<vmem>>, vector<1x1xf32>,
    %c2_i32 = arith.constant 2 : i32
    %48 = arith.cmpi eq, %arg0, %c2_i32 : i32
    %49 = arith.extui %48 : i1 to i32
    %c0_i32_9 = arith.constant 0 : i32
    %50 = arith.cmpi ne, %49, %c0_i32_9 : i32
    scf.if %50 {
      %c0_10 = arith.constant 0 : index
      %c0_11 = arith.constant 0 : index
      %51 = vector.load %arg4[%c0_10, %c0_11] : memref<1x1xf32, #tpu.memory_space<vmem>>, vector<1x1xf32>
      %cst_12 = arith.constant -0.00166666671 : f32
      %52 = vector.broadcast %cst_12 : f32 to vector<1x1xf32>
      %53 = arith.mulf %51, %52 : vector<1x1xf32>
      %c0_13 = arith.constant 0 : index
      %c0_14 = arith.constant 0 : index
      %54 = vector.load %arg3[%c0_13, %c0_14] : memref<1x1xf32, #tpu.memory_space<vmem>>, vector<1x1xf32>
      tpu.vector_store %arg3[%c0_13, %c0_14], %53 {strides = array<i32>} : memref<1x1xf32, #tpu.memory_space<vmem>>, vector<1x1xf32>,
    } else {
    }
    return
  }
  func.func @transform_0(%arg0: i32) -> (i32, i32) {
    %c0_i32 = arith.constant 0 : i32
    %c0_i32_0 = arith.constant 0 : i32
    return %arg0, %c0_i32 : i32, i32
  }
  func.func @transform_1(%arg0: i32) -> (i32, i32) {
    %c0_i32 = arith.constant 0 : i32
    %c0_i32_0 = arith.constant 0 : i32
    return %arg0, %c0_i32 : i32, i32
  }
  func.func @transform_2(%arg0: i32) -> (i32, i32) {
    %c0_i32 = arith.constant 0 : i32
    %c0_i32_0 = arith.constant 0 : i32
    %c0_i32_1 = arith.constant 0 : i32
    return %c0_i32, %c0_i32_0 : i32, i32
  }
}

</mosaic_0001>

<llo_original>
// kernel: tpu_custom_call.1
$region0: #{tpu_custom_call.1}
  #allocation0 [shape = 'u32[]', space=smem, size = 0x4, offset = 0x4, fixed_abs, tag = 'smem constant byte address 0x4 - core index']
  #allocation1 [shape = 'u32[144,128]{1,0:T(1,128)}', space=vmem, size = 0x12000, scoped, tag = 'internal scratch']
  #allocation2 [shape = 'f32[1,1]{1,0:T(1,128)}', space=vmem, size = 0x200, scoped, tag = 'scratch operand']
  %s0 = inlined_call_operand.vmem [shape: bf16[75,128], index: 0, kind: input, shape index: {}]
  %s1 = inlined_call_operand.vmem [shape: s32[96,8], index: 1, kind: input, shape index: {}]
  %s2 = inlined_call_operand.hbm [shape: f32[1,1], index: 2, kind: output, shape index: {}]
  %s3 = sld [smem:[#allocation0]]
  $region49: #{tpu_custom_call.1} parent=0
    _
  %s5 = ssub.s32 1, %s3
  %s6 = scalar_select 0, %s5, %s3
  $region1: #{tpu_custom_call.1} parent=0
    #allocation3 [shape = 'u8[512]{0}', space=vmem, size = 0x400, scoped, tag = 'output window, operand 0, single buffered']
    #allocation4 [shape = 's32[2]{0}', space=sflag, size = 0x8, scoped, tag = 'scoped memory for tpu_custom_call.1']
    %7 = vsyncpa [#allocation4], 0
    loop: start=0, step=1, limit=5
    $region2: #{tpu_custom_call.1} parent=1 // loop_pre_header
      _
    $region3: #{tpu_custom_call.1} parent=1 // loop_header
      %s9 = sphi 0, %s13
      %p10 = scmp.ge.s32.totalorder %s9, 5
      %s19 = sphi 0, %s21
      %s22 = sphi 0, %s19
      %s23 = sphi 0, %s22
      %s39 = sphi 0, %s23
      %s45 = sphi 0, %s47
      %s48 = sphi 0, %s45
      %s49 = sphi 0, %s48
      %s65 = sphi 0, %s49
      %s69 = sphi 0, %s69
      %s71 = sphi 0, %s69
      %s72 = sphi 0, %s71
      %s86 = sphi 0, %s72
    $region4: #{tpu_custom_call.1} parent=1 // loop_header_branch
      %12 = sbr.rel (%p10) target = $region8
    $region5: #{tpu_custom_call.1} parent=1 // loop_body
      %s14 = ssub.s32 %s9, 1
      %s15 = ssub.s32 %s9, 2
      %s16 = sadd.s32 %s9, 1
      %s17 = ssub.s32 %s9, %s16
      %p18 = scmp.eq.s32.totalorder %s17, 0
      %s20 = sadd.s32 %s19, 1
      %s21 = scalar_select %p18, %s19, %s20
      %p24 = pneg %p18
      %p25 = scmp.eq.s32.totalorder %s9, 2
      %p26 = por %p24, %p25
      %p27 = scmp.ne.s32.totalorder %s19, %s22
      %p28 = scmp.eq.s32.totalorder %s9, 0
      %p29 = por %p27, %p28
      %p30 = scmp.ne.s32.totalorder %s19, %s22
      %p31 = scmp.eq.s32.totalorder %s14, 2
      %p32 = por %p30, %p31
      %p33 = scmp.ne.s32.totalorder %s22, %s23
      %p34 = scmp.eq.s32.totalorder %s14, 0
      %p35 = por %p33, %p34
      %p36 = scmp.ne.s32.totalorder %s22, %s23
      %p37 = scmp.eq.s32.totalorder %s15, 2
      %p38 = por %p36, %p37
      %p40 = scmp.ne.s32.totalorder %s23, %s39
      %p41 = scmp.eq.s32.totalorder %s15, 0
      %p42 = por %p40, %p41
      %s43 = ssub.s32 %s9, %s16
      %p44 = scmp.eq.s32.totalorder %s43, 0
      %s46 = sadd.s32 %s45, 1
      %s47 = scalar_select %p44, %s45, %s46
      %p50 = pneg %p44
      %p51 = scmp.eq.s32.totalorder %s9, 2
      %p52 = por %p50, %p51
      %p53 = scmp.ne.s32.totalorder %s45, %s48
      %p54 = scmp.eq.s32.totalorder %s9, 0
      %p55 = por %p53, %p54
      %p56 = scmp.ne.s32.totalorder %s45, %s48
      %p57 = scmp.eq.s32.totalorder %s14, 2
      %p58 = por %p56, %p57
      %p59 = scmp.ne.s32.totalorder %s48, %s49
      %p60 = scmp.eq.s32.totalorder %s14, 0
      %p61 = por %p59, %p60
      %p62 = scmp.ne.s32.totalorder %s48, %s49
      %p63 = scmp.eq.s32.totalorder %s15, 2
      %p64 = por %p62, %p63
      %p66 = scmp.ne.s32.totalorder %s49, %s65
      %p67 = scmp.eq.s32.totalorder %s15, 0
      %p68 = por %p66, %p67
      %s70 = sadd.s32 %s69, 1
      %p73 = scmp.eq.s32.totalorder %s9, 2
      %p74 = scmp.ne.s32.totalorder %s69, %s71
      %p75 = scmp.eq.s32.totalorder %s9, 0
      %p76 = por %p74, %p75
      %p77 = scmp.ne.s32.totalorder %s69, %s71
      %p78 = scmp.eq.s32.totalorder %s14, 2
      %p79 = por %p77, %p78
      %p80 = scmp.ne.s32.totalorder %s71, %s72
      %p81 = scmp.eq.s32.totalorder %s14, 0
      %p82 = por %p80, %p81
      %p83 = scmp.ne.s32.totalorder %s71, %s72
      %p84 = scmp.eq.s32.totalorder %s15, 2
      %p85 = por %p83, %p84
      %p87 = scmp.ne.s32.totalorder %s72, %s86
      %p88 = scmp.eq.s32.totalorder %s15, 0
      %p89 = por %p87, %p88
      %p90 = scmp.le.s32.totalorder 1, %s9
      %p91 = scmp.lt.s32.totalorder %s9, 4
      %p92 = pnand %p90, %p91
      %p93 = pneg %p92
      // Predicated region
      $region9: #{tpu_custom_call.1} parent=5 // pred_check
        _
      $region10: #{tpu_custom_call.1} parent=5 // pred_check_branch
        %95 = sbr.rel (%p92) target = $region12
      $region11: #{tpu_custom_call.1} parent=5 // pred_region
        %s96 = ssub.s32 %s9, 1
      $region12: #{tpu_custom_call.1} parent=5 // pred_fallthru
        _
      %p97 = scmp.lt.s32.totalorder %s9, 3
      // Predicated region
      $region13: #{tpu_custom_call.1} parent=5 // pred_check
        %p98 = pneg %p97
      $region14: #{tpu_custom_call.1} parent=5 // pred_check_branch
        %100 = sbr.rel (%p98) target = $region16
      $region15: #{tpu_custom_call.1} parent=5 // pred_region
        // Predicated region
        $region17: #{tpu_custom_call.1} parent=15 // pred_check
          %p101 = pneg %p29
        $region18: #{tpu_custom_call.1} parent=15 // pred_check_branch
          %103 = sbr.rel (%p101) target = $region20
        $region19: #{tpu_custom_call.1} parent=15 // pred_region
          %s104 = smul.u32 4, %s9
          %s105 = ssub.s32 10, %s104
          %p106 = scmp.lt.s32.totalorder %s105, 4
          %s107 = scalar_select %p106, %s105, 4
          %s108 = smul.u32 64, %s107
          %p109 = scmp.lt.s32.totalorder %s104, 9
          %s110 = scalar_select %p109, %s104, 9
          %s111 = smul.addr %s110, 4
          %s112 = scalar_lea.vmem %s0, %s111
          %s113 = smul.u32 4, %s9
          %s114 = ssub.s32 10, %s113
          %p115 = scmp.lt.s32.totalorder %s114, 4
          %s116 = scalar_select %p115, %s114, 4
          %s117 = smul.u32 64, %s116
        $region20: #{tpu_custom_call.1} parent=15 // pred_fallthru
          _
        // Predicated region
        $region21: #{tpu_custom_call.1} parent=15 // pred_check
          %p118 = pneg %p55
        $region22: #{tpu_custom_call.1} parent=15 // pred_check_branch
          %120 = sbr.rel (%p118) target = $region24
        $region23: #{tpu_custom_call.1} parent=15 // pred_region
          %s121 = smul.u32 4, %s9
          %p122 = scmp.lt.s32.totalorder %s121, 11
          %s123 = scalar_select %p122, %s121, 11
          %s124 = smul.addr %s123, 8
          %s125 = scalar_lea.vmem %s1, %s124
          %s126 = smul.u32 4, %s9
        $region24: #{tpu_custom_call.1} parent=15 // pred_fallthru
          _
      $region16: #{tpu_custom_call.1} parent=5 // pred_fallthru
        _
      %p127 = scmp.le.s32.totalorder 1, %s9
      %p128 = scmp.lt.s32.totalorder %s9, 4
      %p129 = pnand %p127, %p128
      %p130 = pneg %p129
      // Predicated region
      $region25: #{tpu_custom_call.1} parent=5 // pred_check
        _
      $region26: #{tpu_custom_call.1} parent=5 // pred_check_branch
        %132 = sbr.rel (%p129) target = $region28
      $region27: #{tpu_custom_call.1} parent=5 // pred_region
        %s133 = ssub.s32 %s9, 1
        %s134 = smul.u32 4, %s14
        %s135 = ssub.s32 10, %s134
        %p136 = scmp.lt.s32.totalorder %s135, 4
        %s137 = scalar_select %p136, %s135, 4
        %s138 = smul.u32 64, %s137
        %p139 = scmp.lt.s32.totalorder %s134, 9
        %s140 = scalar_select %p139, %s134, 9
        %s141 = smul.addr %s140, 4
        %s142 = scalar_lea.vmem %s0, %s141
        %p143 = pneg %p35
        %p144 = pneg %p32
        %s145 = smul.u32 4, %s14
        %p146 = scmp.lt.s32.totalorder %s145, 11
        %s147 = scalar_select %p146, %s145, 11
        %s148 = smul.addr %s147, 8
        %s149 = scalar_lea.vmem %s1, %s148
        %p150 = pneg %p61
        %p151 = pneg %p58
        %p152 = pneg %p82
        %p153 = pneg %p79
        %s154 = smul.u32 4, %s14
        %s155 = ssub.s32 10, %s154
        %p156 = scmp.lt.s32.totalorder %s155, 4
        %s157 = scalar_select %p156, %s155, 4
        %s158 = smul.u32 64, %s157
        %p159 = scmp.lt.s32.totalorder %s154, 9
        %s160 = scalar_select %p159, %s154, 9
        %s161 = smul.addr %s160, 4
        %s162 = scalar_lea.vmem %s0, %s161
        %s163 = smul.u32 4, %s14
        %s164 = ssub.s32 10, %s163
        %p165 = scmp.lt.s32.totalorder %s164, 4
        %s166 = scalar_select %p165, %s164, 4
        %s167 = smul.u32 64, %s166
        %s168 = smul.u32 4, %s14
        %p169 = scmp.lt.s32.totalorder %s168, 11
        %s170 = scalar_select %p169, %s168, 11
        %s171 = smul.addr %s170, 8
        %s172 = scalar_lea.vmem %s1, %s171
        %s173 = smul.u32 4, %s14
        %p174 = scmp.eq.s32.totalorder %s14, 0
        // Predicated region
        $region29: #{tpu_custom_call.1} parent=27 // pred_check
          %p175 = pneg %p174
        $region30: #{tpu_custom_call.1} parent=27 // pred_check_branch
          %177 = sbr.rel (%p175) target = $region32
        $region31: #{tpu_custom_call.1} parent=27 // pred_region
          %vm178 = vcmask 0
          %179 = vst.msk [vmem:[#allocation2] sm:$0x1] %vm178, 0.0
        $region32: #{tpu_custom_call.1} parent=27 // pred_fallthru
          _
        %v180 = vld [vmem:[%s162] sm:$0xf]
        %v181 = vld [vmem:[%s162 + $0x4] sm:$0xf]
        %v182 = vld [vmem:[%s162 + $0x8] sm:$0xf]
        %v183 = vld [vmem:[%s162 + $0xc] sm:$0xf]
        %v184 = vunpack.c.l.bf16 %v180
        %v185 = vunpack.c.l.bf16 %v181
        %v186 = vunpack.c.l.bf16 %v182
        %v187 = vunpack.c.l.bf16 %v183
        %v188 = vlaneseq
        %v189 = vand.u32 %v188, 127
        %v190 = vld [vmem:[%s172] sm:$0xff]
        %v191 = vld [vmem:[%s172 + $0x8] sm:$0xff]
        %v192 = vld [vmem:[%s172 + $0x10] sm:$0xff]
        %v193 = vld [vmem:[%s172 + $0x18] sm:$0xff]
        %194 = vset.pattern.permute.xlu0 0
        %195 = vperm.xlu0 %194, %v190
        %v196 = vpop.permute.xlu0 %195
        %197 = vset.pattern.permute.xlu0 0
        %198 = vperm.xlu0 %197, %v191
        %v199 = vpop.permute.xlu0 %198
        %200 = vset.pattern.permute.xlu0 0
        %201 = vperm.xlu0 %200, %v192
        %v202 = vpop.permute.xlu0 %201
        %203 = vset.pattern.permute.xlu0 0
        %204 = vperm.xlu0 %203, %v193
        %v205 = vpop.permute.xlu0 %204
        %vm206 = vcmp.eq.s32.totalorder %v189, %v196
        %vm207 = vcmp.eq.s32.totalorder %v189, %v199
        %vm208 = vcmp.eq.s32.totalorder %v189, %v202
        %vm209 = vcmp.eq.s32.totalorder %v189, %v205
        %210 = vset.pattern.permute.xlu0 1
        %211 = vperm.xlu0 %210, %v190
        %v212 = vpop.permute.xlu0 %211
        %213 = vset.pattern.permute.xlu0 1
        %214 = vperm.xlu0 %213, %v191
        %v215 = vpop.permute.xlu0 %214
        %216 = vset.pattern.permute.xlu0 1
        %217 = vperm.xlu0 %216, %v192
        %v218 = vpop.permute.xlu0 %217
        %219 = vset.pattern.permute.xlu0 1
        %220 = vperm.xlu0 %219, %v193
        %v221 = vpop.permute.xlu0 %220
        %vm222 = vcmp.eq.s32.totalorder %v189, %v212
        %vm223 = vcmp.eq.s32.totalorder %v189, %v215
        %vm224 = vcmp.eq.s32.totalorder %v189, %v218
        %vm225 = vcmp.eq.s32.totalorder %v189, %v221
        %vm226 = vmor %vm206, %vm222
        %vm227 = vmor %vm207, %vm223
        %vm228 = vmor %vm208, %vm224
        %vm229 = vmor %vm209, %vm225
        %230 = vset.pattern.permute.xlu0 2
        %231 = vperm.xlu0 %230, %v190
        %v232 = vpop.permute.xlu0 %231
        %233 = vset.pattern.permute.xlu0 2
        %234 = vperm.xlu0 %233, %v191
        %v235 = vpop.permute.xlu0 %234
        %236 = vset.pattern.permute.xlu0 2
        %237 = vperm.xlu0 %236, %v192
        %v238 = vpop.permute.xlu0 %237
        %239 = vset.pattern.permute.xlu0 2
        %240 = vperm.xlu0 %239, %v193
        %v241 = vpop.permute.xlu0 %240
        %vm242 = vcmp.eq.s32.totalorder %v189, %v232
        %vm243 = vcmp.eq.s32.totalorder %v189, %v235
        %vm244 = vcmp.eq.s32.totalorder %v189, %v238
        %vm245 = vcmp.eq.s32.totalorder %v189, %v241
        %vm246 = vmor %vm226, %vm242
        %vm247 = vmor %vm227, %vm243
        %vm248 = vmor %vm228, %vm244
        %vm249 = vmor %vm229, %vm245
        %250 = vset.pattern.permute.xlu0 3
        %251 = vperm.xlu0 %250, %v190
        %v252 = vpop.permute.xlu0 %251
        %253 = vset.pattern.permute.xlu0 3
        %254 = vperm.xlu0 %253, %v191
        %v255 = vpop.permute.xlu0 %254
        %256 = vset.pattern.permute.xlu0 3
        %257 = vperm.xlu0 %256, %v192
        %v258 = vpop.permute.xlu0 %257
        %259 = vset.pattern.permute.xlu0 3
        %260 = vperm.xlu0 %259, %v193
        %v261 = vpop.permute.xlu0 %260
        %vm262 = vcmp.eq.s32.totalorder %v189, %v252
        %vm263 = vcmp.eq.s32.totalorder %v189, %v255
        %vm264 = vcmp.eq.s32.totalorder %v189, %v258
        %vm265 = vcmp.eq.s32.totalorder %v189, %v261
        %vm266 = vmor %vm246, %vm262
        %vm267 = vmor %vm247, %vm263
        %vm268 = vmor %vm248, %vm264
        %vm269 = vmor %vm249, %vm265
        %270 = vset.pattern.permute.xlu0 4
        %271 = vperm.xlu0 %270, %v190
        %v272 = vpop.permute.xlu0 %271
        %273 = vset.pattern.permute.xlu0 4
        %274 = vperm.xlu0 %273, %v191
        %v275 = vpop.permute.xlu0 %274
        %276 = vset.pattern.permute.xlu0 4
        %277 = vperm.xlu0 %276, %v192
        %v278 = vpop.permute.xlu0 %277
        %279 = vset.pattern.permute.xlu0 4
        %280 = vperm.xlu0 %279, %v193
        %v281 = vpop.permute.xlu0 %280
        %vm282 = vcmp.eq.s32.totalorder %v189, %v272
        %vm283 = vcmp.eq.s32.totalorder %v189, %v275
        %vm284 = vcmp.eq.s32.totalorder %v189, %v278
        %vm285 = vcmp.eq.s32.totalorder %v189, %v281
        %vm286 = vmor %vm266, %vm282
        %vm287 = vmor %vm267, %vm283
        %vm288 = vmor %vm268, %vm284
        %vm289 = vmor %vm269, %vm285
        %290 = vset.pattern.permute.xlu0 5
        %291 = vperm.xlu0 %290, %v190
        %v292 = vpop.permute.xlu0 %291
        %293 = vset.pattern.permute.xlu0 5
        %294 = vperm.xlu0 %293, %v191
        %v295 = vpop.permute.xlu0 %294
        %296 = vset.pattern.permute.xlu0 5
        %297 = vperm.xlu0 %296, %v192
        %v298 = vpop.permute.xlu0 %297
        %299 = vset.pattern.permute.xlu0 5
        %300 = vperm.xlu0 %299, %v193
        %v301 = vpop.permute.xlu0 %300
        %vm302 = vcmp.eq.s32.totalorder %v189, %v292
        %vm303 = vcmp.eq.s32.totalorder %v189, %v295
        %vm304 = vcmp.eq.s32.totalorder %v189, %v298
        %vm305 = vcmp.eq.s32.totalorder %v189, %v301
        %vm306 = vmor %vm286, %vm302
        %vm307 = vmor %vm287, %vm303
        %vm308 = vmor %vm288, %vm304
        %vm309 = vmor %vm289, %vm305
        %310 = vset.pattern.permute.xlu0 6
        %311 = vperm.xlu0 %310, %v190
        %v312 = vpop.permute.xlu0 %311
        %313 = vset.pattern.permute.xlu0 6
        %314 = vperm.xlu0 %313, %v191
        %v315 = vpop.permute.xlu0 %314
        %316 = vset.pattern.permute.xlu0 6
        %317 = vperm.xlu0 %316, %v192
        %v318 = vpop.permute.xlu0 %317
        %319 = vset.pattern.permute.xlu0 6
        %320 = vperm.xlu0 %319, %v193
        %v321 = vpop.permute.xlu0 %320
        %vm322 = vcmp.eq.s32.totalorder %v189, %v312
        %vm323 = vcmp.eq.s32.totalorder %v189, %v315
        %vm324 = vcmp.eq.s32.totalorder %v189, %v318
        %vm325 = vcmp.eq.s32.totalorder %v189, %v321
        %vm326 = vmor %vm306, %vm322
        %vm327 = vmor %vm307, %vm323
        %vm328 = vmor %vm308, %vm324
        %vm329 = vmor %vm309, %vm325
        %330 = vset.pattern.permute.xlu0 7
        %331 = vperm.xlu0 %330, %v190
        %v332 = vpop.permute.xlu0 %331
        %333 = vset.pattern.permute.xlu0 7
        %334 = vperm.xlu0 %333, %v191
        %v335 = vpop.permute.xlu0 %334
        %336 = vset.pattern.permute.xlu0 7
        %337 = vperm.xlu0 %336, %v192
        %v338 = vpop.permute.xlu0 %337
        %339 = vset.pattern.permute.xlu0 7
        %340 = vperm.xlu0 %339, %v193
        %v341 = vpop.permute.xlu0 %340
        %vm342 = vcmp.eq.s32.totalorder %v189, %v332
        %vm343 = vcmp.eq.s32.totalorder %v189, %v335
        %vm344 = vcmp.eq.s32.totalorder %v189, %v338
        %vm345 = vcmp.eq.s32.totalorder %v189, %v341
        %vm346 = vmor %vm326, %vm342
        %vm347 = vmor %vm327, %vm343
        %vm348 = vmor %vm328, %vm344
        %vm349 = vmor %vm329, %vm345
        %v350 = vsel %vm346, %v184, 0.0
        %v351 = vsel %vm347, %v185, 0.0
        %v352 = vsel %vm348, %v186, 0.0
        %v353 = vsel %vm349, %v187, 0.0
        %v354 = vld [vmem:[#allocation2] sm:$0x1]
        %v355 = vadd.f32 %v350, %v351
        %v356 = vadd.f32 %v355, %v352
        %v357 = vadd.f32 %v356, %v353
        %358 = vadd.xlane.f32.xlu0 %v357
        %v359 = vpop.xlane.xlu0 %358
        %v360 = vrot.slane %v359, 4
        %v361 = vadd.f32 %v359, %v360
        %v362 = vrot.slane %v361, 2
        %v363 = vadd.f32 %v361, %v362
        %v364 = vrot.slane %v363, 1
        %v365 = vadd.f32 %v363, %v364
        %s366 = vtos %v365
        %v367 = vstv %s366
        %v368 = vadd.f32 %v354, %v367
        %vm369 = vcmask 0
        %370 = vst.msk [vmem:[#allocation2] sm:$0x1] %vm369, %v368
        %p371 = scmp.eq.s32.totalorder %s14, 2
        // Predicated region
        $region33: #{tpu_custom_call.1} parent=27 // pred_check
          %p372 = pneg %p371
        $region34: #{tpu_custom_call.1} parent=27 // pred_check_branch
          %374 = sbr.rel (%p372) target = $region36
        $region35: #{tpu_custom_call.1} parent=27 // pred_region
          %v375 = vld [vmem:[#allocation2] sm:$0x1]
          %v376 = vmul.f32 %v375, -0.0016666667
          %377 = vst.msk [vmem:[#allocation3] sm:$0x1] %vm369, %v376
        $region36: #{tpu_custom_call.1} parent=27 // pred_fallthru
          _
        // Predicated region
        $region37: #{tpu_custom_call.1} parent=27 // pred_check
          %p378 = pneg %p79
        $region38: #{tpu_custom_call.1} parent=27 // pred_check_branch
          %380 = sbr.rel (%p378) target = $region40
        $region39: #{tpu_custom_call.1} parent=27 // pred_region
          %s382 = ssub.s32 16, 16
          %383 = vsyncadd [#allocation4], %s382
          %s385 = sshll.u32 [#allocation3], 4
          %s386 = int_to_ptr.vmem [resolvable:$true] %s385
          %388 = dma.vmem_to_hbm [thread:$0]  %s386, 16, %s2, [#allocation4]
        $region40: #{tpu_custom_call.1} parent=27 // pred_fallthru
          _
        // Predicated region
        $region41: #{tpu_custom_call.1} parent=27 // pred_check
          %p389 = pneg %p79
        $region42: #{tpu_custom_call.1} parent=27 // pred_check_branch
          %391 = sbr.rel (%p389) target = $region44
        $region43: #{tpu_custom_call.1} parent=27 // pred_region
          %392 = dma.done [#allocation4], 16
        $region44: #{tpu_custom_call.1} parent=27 // pred_fallthru
          _
      $region28: #{tpu_custom_call.1} parent=5 // pred_fallthru
        _
      %p393 = scmp.le.s32.totalorder 2, %s9
      // Predicated region
      $region45: #{tpu_custom_call.1} parent=5 // pred_check
        %p394 = pneg %p393
      $region46: #{tpu_custom_call.1} parent=5 // pred_check_branch
        %396 = sbr.rel (%p394) target = $region48
      $region47: #{tpu_custom_call.1} parent=5 // pred_region
        %s397 = ssub.s32 %s9, 2
      $region48: #{tpu_custom_call.1} parent=5 // pred_fallthru
        _
    $region6: #{tpu_custom_call.1} parent=1 // loop_footer
      %s13 = sadd.s32 1, %s9
    $region7: #{tpu_custom_call.1} parent=1 // loop_footer_branch
      %8 = sbr.rel target = $region3
    $region8: #{tpu_custom_call.1} parent=1 // loop_exit
      _
    %398 = vsyncpa [#allocation4], 1
    %s399 = scalar_lea.sflag [#allocation4], 1
    %400 = vsyncpa %s399, 1

</llo_original>
